<compile_context>
chip_gen: v7x
topology: tpu7x:2x2x1
jax: 0.10.0
libtpu: 0.0.40
codegen_flags: <defaults>
</compile_context>

<pallas_src>
import functools

import jax
import jax.numpy as jnp
from jax.experimental import pallas as pl
from jax.experimental.pallas import tpu as pltpu


def _classifier_kernel(x_ref, w_ref, b_ref, o_ref, acc_ref, *, scale):
    e = pl.program_id(1)

    @pl.when(e == 0)
    def _():
        acc_ref[...] = jnp.zeros_like(acc_ref)

    xe = x_ref[0]                                             # [TB, C, HW] (NCHW tile)
    # Spatial sum over the lane axis (AvgPool's /HW is folded into `scale`), f32 accum.
    pooled = jnp.sum(xe, axis=-1, dtype=jnp.float32)          # [TB, C]

    # Weights are resident in VMEM as [E, C, NC_pad]; pick this expert's slab.
    w = w_ref[e]                                              # [C, NC_pad]
    acc_ref[...] += jnp.dot(pooled.astype(w.dtype), w,
                            preferred_element_type=jnp.float32)

    @pl.when(e == pl.num_programs(1) - 1)
    def _():
        # scale = s / (E * HW); b_ref = mean_e(bias_e) * s (already padded, f32).
        o_ref[...] = (acc_ref[...] * scale + b_ref[...]).astype(o_ref.dtype)


def _round_up(v, m):
    return ((v + m - 1) // m) * m


def _vmem_capacity_bytes():
    # Generation-aware VMEM capacity; conservative fallback (v7x per-core = 64 MiB).
    try:
        return int(pltpu.get_tpu_info().vmem_capacity_bytes)
    except Exception:
        return 64 * 1024 * 1024


def classifier_forward(x, weights, biases, *, s=1.0):
    """x: [E, B, C, H, W] (NCHW per expert), weights: [E, C, NC], biases: [E, NC]."""
    E, B, C, H, W = x.shape
    NC = weights.shape[-1]
    assert H == 7 and W == 7, "Classifier expects 7x7 feature maps (AvgPool2d(7, stride=1))"
    HW = H * W

    # ---- native-layout input: reshape only (free), no transpose, no pad ----
    x_r = x.reshape(E, B, C, HW)

    # ---- lane-dense padded class dim ----
    NC_pad = _round_up(NC, 128)
    w_p = jnp.zeros((E, C, NC_pad), weights.dtype).at[:, :, :NC].set(weights)
    b_eff = jnp.mean(biases.astype(jnp.float32), axis=0) * float(s)          # [NC]
    b_p = jnp.zeros((1, NC_pad), jnp.float32).at[0, :NC].set(b_eff)

    # ---- per-generation batch tiling (no batch padding; ragged last tile is masked) ----
    itemsize_x = jnp.dtype(x.dtype).itemsize
    itemsize_w = jnp.dtype(weights.dtype).itemsize
    itemsize_o = itemsize_x

    vmem_cap = _vmem_capacity_bytes()
    vmem_limit = min(int(0.75 * vmem_cap), 100 * 1024 * 1024)

    C_pad8 = _round_up(C, 8)
    HW_lane = _round_up(HW, 128)                 # HW pads to 128 lanes inside VMEM
    fixed = (2 * E * C_pad8 * NC_pad * itemsize_w        # resident weights (worst-case x2)
             + 2 * 8 * NC_pad * 4)                        # fused bias
    per_row = (2 * C_pad8 * HW_lane * itemsize_x          # double-buffered x tile
               + NC_pad * 4                               # f32 accumulator
               + 2 * NC_pad * itemsize_o)                 # double-buffered output tile
    budget = max(vmem_limit - fixed - (4 << 20), per_row * 8)
    tb_max = max(8, budget // per_row)

    if B <= tb_max:
        TB = B                                   # single tile, full-dim block (no 8-align needed)
    else:
        n_tiles = -(-B // tb_max)
        TB = max(8, min(tb_max, ((B // n_tiles) // 8) * 8))

    grid_b = -(-B // TB)
    # v7x has 2 TensorCores: make sure there are >=2 "parallel" batch tiles when possible.
    if grid_b == 1 and B >= 16:
        TB = max(8, _round_up((B + 1) // 2, 8))
        grid_b = -(-B // TB)

    scale = float(s) / (E * HW)
    kernel = functools.partial(_classifier_kernel, scale=scale)

    flops = E * B * (C * HW + 2 * C * NC_pad)
    bytes_accessed = (E * B * C * HW * itemsize_x
                      + E * C * NC_pad * itemsize_w
                      + NC_pad * 4
                      + B * NC_pad * itemsize_o)
    cost = pl.CostEstimate(flops=flops, transcendentals=0, bytes_accessed=bytes_accessed)

    out = pl.pallas_call(
        kernel,
        out_shape=jax.ShapeDtypeStruct((B, NC_pad), x.dtype),
        grid_spec=pltpu.PrefetchScalarGridSpec(
            num_scalar_prefetch=0,
            grid=(grid_b, E),
            in_specs=[
                # activations: native NCHW tile, contiguous HBM burst per (e, b) plane
                pl.BlockSpec((1, TB, C, HW), lambda bi, e: (e, bi, 0, 0)),
                # weights: one constant block -> fetched once, resident in VMEM
                pl.BlockSpec((E, C, NC_pad), lambda bi, e: (0, 0, 0)),
                # fused bias (mean over experts, scaled)
                pl.BlockSpec((1, NC_pad), lambda bi, e: (0, 0)),
            ],
            out_specs=pl.BlockSpec((TB, NC_pad), lambda bi, e: (bi, 0)),
            scratch_shapes=[pltpu.VMEM((TB, NC_pad), jnp.float32)],
        ),
        compiler_params=pltpu.CompilerParams(
            dimension_semantics=("parallel", "arbitrary"),
            vmem_limit_bytes=vmem_limit,
        ),
        cost_estimate=cost,
    )(x_r, w_p, b_p)

    return out[:, :NC]


def reference_forward(x, weights, biases, s=1.0):
    """Pure-JAX reference matching the PyTorch module."""
    E, B, C, H, W = x.shape
    outs = []
    for e in range(E):
        pooled = jnp.mean(x[e].reshape(B, C, H * W), axis=-1)     # AvgPool2d(7) + flatten
        out = pooled @ weights[e] + biases[e]
        outs.append(out * s)
    return jnp.stack(outs, axis=1).mean(axis=1)


if __name__ == "__main__":
    # Small shapes consistent with the module: num_experts=3, batch=2,
    # feat_in=16, spatial=7x7 (required by AvgPool2d(7)), num_classes=8.
    E, B, C, H, W, NC = 3, 2, 16, 7, 7, 8
    s = 1.0  # use_norm=False => s forced to 1 in __init__

    key = jax.random.PRNGKey(0)
    kx, kw, kb = jax.random.split(key, 3)

    x = jax.random.normal(kx, (E, B, C, H, W), dtype=jnp.float32)
    # Deterministic synthetic Linear params (nn.Linear(feat_in, num_classes) per expert).
    bound = 1.0 / (C ** 0.5)
    weights = jax.random.uniform(kw, (E, C, NC), jnp.float32, -bound, bound)
    biases = jax.random.uniform(kb, (E, NC), jnp.float32, -bound, bound)

    out = classifier_forward(x, weights, biases, s=s)
    out = jax.block_until_ready(out)

    ref = reference_forward(x, weights, biases, s=s)
    assert out.shape == (B, NC)
    assert jnp.allclose(out, ref, atol=1e-5, rtol=1e-5), (out, ref)

    print("KERNEL_OK")
</pallas_src>

<mosaic_0001>
module attributes {stable_mosaic.version = 11 : i64} {
  func.func @_classifier_kernel(%arg0: i32, %arg1: i32, %arg2: memref<1x2x16x49xf32, #tpu.memory_space<vmem>>, %arg3: memref<3x16x128xf32, #tpu.memory_space<vmem>>, %arg4: memref<1x128xf32, #tpu.memory_space<vmem>>, %arg5: memref<2x128xf32, #tpu.memory_space<vmem>>, %arg6: memref<2x128xf32, #tpu.memory_space<vmem>>) attributes {dimension_semantics = [#tpu.dimension_semantics<parallel>, #tpu.dimension_semantics<arbitrary>], iteration_bounds = array<i64: 1, 3>, scalar_prefetch = 0 : i64, scratch_operands = 1 : i64, tpu.core_type = #tpu.core_type<tc>, window_params = [{transform_indices = @transform_0, window_bounds = array<i64: 1, 2, 16, 49>}, {pipeline_mode = #tpu.pipeline_mode<synchronous>, transform_indices = @transform_1, window_bounds = array<i64: 3, 16, 128>}, {pipeline_mode = #tpu.pipeline_mode<synchronous>, transform_indices = @transform_2, window_bounds = array<i64: 1, 128>}, {transform_indices = @transform_3, window_bounds = array<i64: 2, 128>}]} {
    %c0_i32 = arith.constant 0 : i32
    %0 = arith.cmpi eq, %arg1, %c0_i32 : i32
    %1 = arith.extui %0 : i1 to i32
    %c0_i32_0 = arith.constant 0 : i32
    %2 = arith.cmpi ne, %1, %c0_i32_0 : i32
    scf.if %2 {
      %cst_12 = arith.constant 0.000000e+00 : f32
      %16 = vector.broadcast %cst_12 : f32 to vector<2x128xf32>
      %c0_13 = arith.constant 0 : index
      %c0_14 = arith.constant 0 : index
      %17 = vector.load %arg6[%c0_13, %c0_14] : memref<2x128xf32, #tpu.memory_space<vmem>>, vector<2x128xf32>
      tpu.vector_store %arg6[%c0_13, %c0_14], %16 {strides = array<i32>} : memref<2x128xf32, #tpu.memory_space<vmem>>, vector<2x128xf32>,
    } else {
    }
    %c0 = arith.constant 0 : index
    %c0_1 = arith.constant 0 : index
    %c0_2 = arith.constant 0 : index
    %c0_3 = arith.constant 0 : index
    %3 = vector.load %arg2[%c0, %c0_1, %c0_2, %c0_3] : memref<1x2x16x49xf32, #tpu.memory_space<vmem>>, vector<1x2x16x49xf32>
    %4 = vector.shape_cast %3 : vector<1x2x16x49xf32> to vector<2x16x49xf32>
    %cst = arith.constant dense<0.000000e+00> : vector<2x16xf32>
    %5 = vector.multi_reduction <add>, %4, %cst [2] : vector<2x16x49xf32> to vector<2x16xf32>
    %6 = arith.index_cast %arg1 : i32 to index
    %c0_4 = arith.constant 0 : index
    %c0_5 = arith.constant 0 : index
    %7 = vector.load %arg3[%6, %c0_4, %c0_5] : memref<3x16x128xf32, #tpu.memory_space<vmem>>, vector<1x16x128xf32>
    %8 = vector.shape_cast %7 : vector<1x16x128xf32> to vector<16x128xf32>
    %c0_6 = arith.constant 0 : index
    %c0_7 = arith.constant 0 : index
    %9 = vector.load %arg6[%c0_6, %c0_7] : memref<2x128xf32, #tpu.memory_space<vmem>>, vector<2x128xf32>
    %cst_8 = arith.constant dense<0.000000e+00> : vector<2x128xf32>
    %10 = tpu.matmul %5, %8, %cst_8 {dimension_numbers = #tpu.dot_dimension_numbers<[1], [0], [0], [1], [0, 0, 1, 1], [], []>} : vector<2x16xf32>, vector<16x128xf32>, vector<2x128xf32> -> vector<2x128xf32>
    %11 = arith.addf %9, %10 : vector<2x128xf32>
    %c0_9 = arith.constant 0 : index
    %c0_10 = arith.constant 0 : index
    %12 = vector.load %arg6[%c0_9, %c0_10] : memref<2x128xf32, #tpu.memory_space<vmem>>, vector<2x128xf32>
    tpu.vector_store %arg6[%c0_9, %c0_10], %11 {strides = array<i32>} : memref<2x128xf32, #tpu.memory_space<vmem>>, vector<2x128xf32>,
    %c2_i32 = arith.constant 2 : i32
    %13 = arith.cmpi eq, %arg1, %c2_i32 : i32
    %14 = arith.extui %13 : i1 to i32
    %c0_i32_11 = arith.constant 0 : i32
    %15 = arith.cmpi ne, %14, %c0_i32_11 : i32
    scf.if %15 {
      %c0_12 = arith.constant 0 : index
      %c0_13 = arith.constant 0 : index
      %16 = vector.load %arg6[%c0_12, %c0_13] : memref<2x128xf32, #tpu.memory_space<vmem>>, vector<2x128xf32>
      %cst_14 = arith.constant 0.00680272094 : f32
      %17 = vector.broadcast %cst_14 : f32 to vector<2x128xf32>
      %18 = arith.mulf %16, %17 : vector<2x128xf32>
      %c0_15 = arith.constant 0 : index
      %c0_16 = arith.constant 0 : index
      %19 = vector.load %arg4[%c0_15, %c0_16] : memref<1x128xf32, #tpu.memory_space<vmem>>, vector<1x128xf32>
      %20 = vector.broadcast %19 : vector<1x128xf32> to vector<2x128xf32>
      %21 = arith.addf %18, %20 : vector<2x128xf32>
      %c0_17 = arith.constant 0 : index
      %c0_18 = arith.constant 0 : index
      %22 = vector.load %arg5[%c0_17, %c0_18] : memref<2x128xf32, #tpu.memory_space<vmem>>, vector<2x128xf32>
      tpu.vector_store %arg5[%c0_17, %c0_18], %21 {strides = array<i32>} : memref<2x128xf32, #tpu.memory_space<vmem>>, vector<2x128xf32>,
    } else {
    }
    return
  }
  func.func @transform_0(%arg0: i32, %arg1: i32) -> (i32, i32, i32, i32) {
    %c0_i32 = arith.constant 0 : i32
    %c0_i32_0 = arith.constant 0 : i32
    %c0_i32_1 = arith.constant 0 : i32
    return %arg1, %arg0, %c0_i32, %c0_i32_0 : i32, i32, i32, i32
  }
  func.func @transform_1(%arg0: i32, %arg1: i32) -> (i32, i32, i32) {
    %c0_i32 = arith.constant 0 : i32
    %c0_i32_0 = arith.constant 0 : i32
    %c0_i32_1 = arith.constant 0 : i32
    %c0_i32_2 = arith.constant 0 : i32
    return %c0_i32, %c0_i32_0, %c0_i32_1 : i32, i32, i32
  }
  func.func @transform_2(%arg0: i32, %arg1: i32) -> (i32, i32) {
    %c0_i32 = arith.constant 0 : i32
    %c0_i32_0 = arith.constant 0 : i32
    %c0_i32_1 = arith.constant 0 : i32
    return %c0_i32, %c0_i32_0 : i32, i32
  }
  func.func @transform_3(%arg0: i32, %arg1: i32) -> (i32, i32) {
    %c0_i32 = arith.constant 0 : i32
    %c0_i32_0 = arith.constant 0 : i32
    return %arg0, %c0_i32 : i32, i32
  }
}

</mosaic_0001>

<llo_original>
// kernel: tpu_custom_call.1
$region0: #{tpu_custom_call.1}
  #allocation0 [shape = 'u32[]', space=smem, size = 0x4, offset = 0x4, fixed_abs, tag = 'smem constant byte address 0x4 - core index']
  #allocation1 [shape = 'u32[144,128]{1,0:T(1,128)}', space=vmem, size = 0x12000, scoped, tag = 'internal scratch']
  #allocation2 [shape = 'f32[2,128]{1,0:T(2,128)}', space=vmem, size = 0x400, scoped, tag = 'scratch operand']
  %s0 = inlined_call_operand.hbm [shape: f32[3,2,16,49], index: 0, kind: input, shape index: {}]
  %s1 = inlined_call_operand.hbm [shape: f32[3,16,128], index: 1, kind: input, shape index: {}]
  %s2 = inlined_call_operand.vmem [shape: f32[1,128], index: 2, kind: input, shape index: {}]
  %s3 = inlined_call_operand.hbm [shape: f32[2,128], index: 3, kind: output, shape index: {}]
  %s4 = sld [smem:[#allocation0]]
  $region61: #{tpu_custom_call.1} parent=0
    _
  %s6 = ssub.s32 1, %s4
  %s7 = scalar_select 0, %s6, %s4
  $region1: #{tpu_custom_call.1} parent=0
    #allocation3 [shape = 'u8[32768]{0}', space=vmem, size = 0x8000, scoped, tag = 'input window, operand 0']
    #allocation4 [shape = 's32[2]{0}', space=sflag, size = 0x8, scoped, tag = 'scoped memory for tpu_custom_call.1']
    #allocation5 [shape = 's32[2]{0}', space=sflag, size = 0x8, scoped, tag = 'scoped memory for tpu_custom_call.1']
    #allocation6 [shape = 'u8[24576]{0}', space=vmem, size = 0x6000, scoped, tag = 'input window, operand 1, single buffered']
    #allocation7 [shape = 's32[1]{0}', space=sflag, size = 0x4, scoped, tag = 'scoped memory for tpu_custom_call.1']
    #allocation8 [shape = 'u8[1024]{0}', space=vmem, size = 0x400, scoped, tag = 'output window, operand 0, single buffered']
    %8 = vsyncpa [#allocation4], 0
    %s9 = scalar_lea.sflag [#allocation4], 1
    %10 = vsyncpa %s9, 0
    %11 = vsyncpa [#allocation7], 0
    %12 = vsyncpa [#allocation5], 0
    loop: start=0, step=1, limit=5
    $region2: #{tpu_custom_call.1} parent=1 // loop_pre_header
      _
    $region3: #{tpu_custom_call.1} parent=1 // loop_header
      %s14 = sphi 0, %s18
      %p15 = scmp.ge.s32.totalorder %s14, 5
      %s21 = sphi 0, %s33
      %s22 = sphi 0, %s29
      %s23 = sphi 0, %s21
      %s24 = sphi 0, %s22
      %s25 = sphi 0, %s23
      %s26 = sphi 0, %s24
      %s38 = sphi 0, %s40
      %s41 = sphi 0, %s38
      %s42 = sphi 0, %s41
      %s58 = sphi 0, %s42
      %s62 = sphi 0, %s62
      %s64 = sphi 0, %s62
      %s65 = sphi 0, %s64
      %s79 = sphi 0, %s65
      %s83 = sphi 0, %s83
      %s85 = sphi 0, %s83
      %s86 = sphi 0, %s85
      %s100 = sphi 0, %s86
      %s106 = sphi 0, %s108
      %s109 = sphi 0, %s106
      %s110 = sphi 0, %s109
      %s126 = sphi 0, %s110
    $region4: #{tpu_custom_call.1} parent=1 // loop_header_branch
      %17 = sbr.rel (%p15) target = $region8
    $region5: #{tpu_custom_call.1} parent=1 // loop_body
      %s19 = ssub.s32 %s14, 1
      %s20 = ssub.s32 %s14, 2
      %s27 = sadd.s32 1, %s22
      %p28 = scmp.ge.s32.totalorder %s27, 3
      %s29 = scalar_select %p28, 0, %s27
      %s30 = sadd.s32 1, %s21
      %s31 = scalar_select %p28, %s30, %s21
      %p32 = scmp.ge.s32.totalorder %s31, 1
      %s33 = scalar_select %p32, 0, %s31
      %s34 = ssub.s32 %s22, %s29
      %s35 = ssub.s32 %s21, %s33
      %s36 = sor.u32 %s34, %s35
      %p37 = scmp.eq.s32.totalorder %s36, 0
      %s39 = sadd.s32 %s38, 1
      %s40 = scalar_select %p37, %s38, %s39
      %p43 = pneg %p37
      %p44 = scmp.eq.s32.totalorder %s14, 2
      %p45 = por %p43, %p44
      %p46 = scmp.ne.s32.totalorder %s38, %s41
      %p47 = scmp.eq.s32.totalorder %s14, 0
      %p48 = por %p46, %p47
      %p49 = scmp.ne.s32.totalorder %s38, %s41
      %p50 = scmp.eq.s32.totalorder %s19, 2
      %p51 = por %p49, %p50
      %p52 = scmp.ne.s32.totalorder %s41, %s42
      %p53 = scmp.eq.s32.totalorder %s19, 0
      %p54 = por %p52, %p53
      %p55 = scmp.ne.s32.totalorder %s41, %s42
      %p56 = scmp.eq.s32.totalorder %s20, 2
      %p57 = por %p55, %p56
      %p59 = scmp.ne.s32.totalorder %s42, %s58
      %p60 = scmp.eq.s32.totalorder %s20, 0
      %p61 = por %p59, %p60
      %s63 = sadd.s32 %s62, 1
      %p66 = scmp.eq.s32.totalorder %s14, 2
      %p67 = scmp.ne.s32.totalorder %s62, %s64
      %p68 = scmp.eq.s32.totalorder %s14, 0
      %p69 = por %p67, %p68
      %p70 = scmp.ne.s32.totalorder %s62, %s64
      %p71 = scmp.eq.s32.totalorder %s19, 2
      %p72 = por %p70, %p71
      %p73 = scmp.ne.s32.totalorder %s64, %s65
      %p74 = scmp.eq.s32.totalorder %s19, 0
      %p75 = por %p73, %p74
      %p76 = scmp.ne.s32.totalorder %s64, %s65
      %p77 = scmp.eq.s32.totalorder %s20, 2
      %p78 = por %p76, %p77
      %p80 = scmp.ne.s32.totalorder %s65, %s79
      %p81 = scmp.eq.s32.totalorder %s20, 0
      %p82 = por %p80, %p81
      %s84 = sadd.s32 %s83, 1
      %p87 = scmp.eq.s32.totalorder %s14, 2
      %p88 = scmp.ne.s32.totalorder %s83, %s85
      %p89 = scmp.eq.s32.totalorder %s14, 0
      %p90 = por %p88, %p89
      %p91 = scmp.ne.s32.totalorder %s83, %s85
      %p92 = scmp.eq.s32.totalorder %s19, 2
      %p93 = por %p91, %p92
      %p94 = scmp.ne.s32.totalorder %s85, %s86
      %p95 = scmp.eq.s32.totalorder %s19, 0
      %p96 = por %p94, %p95
      %p97 = scmp.ne.s32.totalorder %s85, %s86
      %p98 = scmp.eq.s32.totalorder %s20, 2
      %p99 = por %p97, %p98
      %p101 = scmp.ne.s32.totalorder %s86, %s100
      %p102 = scmp.eq.s32.totalorder %s20, 0
      %p103 = por %p101, %p102
      %s104 = ssub.s32 %s21, %s33
      %p105 = scmp.eq.s32.totalorder %s104, 0
      %s107 = sadd.s32 %s106, 1
      %s108 = scalar_select %p105, %s106, %s107
      %p111 = pneg %p105
      %p112 = scmp.eq.s32.totalorder %s14, 2
      %p113 = por %p111, %p112
      %p114 = scmp.ne.s32.totalorder %s106, %s109
      %p115 = scmp.eq.s32.totalorder %s14, 0
      %p116 = por %p114, %p115
      %p117 = scmp.ne.s32.totalorder %s106, %s109
      %p118 = scmp.eq.s32.totalorder %s19, 2
      %p119 = por %p117, %p118
      %p120 = scmp.ne.s32.totalorder %s109, %s110
      %p121 = scmp.eq.s32.totalorder %s19, 0
      %p122 = por %p120, %p121
      %p123 = scmp.ne.s32.totalorder %s109, %s110
      %p124 = scmp.eq.s32.totalorder %s20, 2
      %p125 = por %p123, %p124
      %p127 = scmp.ne.s32.totalorder %s110, %s126
      %p128 = scmp.eq.s32.totalorder %s20, 0
      %p129 = por %p127, %p128
      %p130 = scmp.le.s32.totalorder 1, %s14
      %p131 = scmp.lt.s32.totalorder %s14, 4
      %p132 = pnand %p130, %p131
      %p133 = pneg %p132
      // Predicated region
      $region9: #{tpu_custom_call.1} parent=5 // pred_check
        _
      $region10: #{tpu_custom_call.1} parent=5 // pred_check_branch
        %135 = sbr.rel (%p132) target = $region12
      $region11: #{tpu_custom_call.1} parent=5 // pred_region
        %s136 = ssub.s32 %s14, 1
        // Predicated region
        $region13: #{tpu_custom_call.1} parent=11 // pred_check
          %p137 = pneg %p75
        $region14: #{tpu_custom_call.1} parent=11 // pred_check_branch
          %139 = sbr.rel (%p137) target = $region16
        $region15: #{tpu_custom_call.1} parent=11 // pred_region
          %s141 = ssub.s32 768, 768
          %142 = vsyncadd [#allocation7], %s141
          %s143 = sshll.u32 [#allocation6], 4
          %s144 = int_to_ptr.vmem [resolvable:$true] %s143
          %149 = dma.hbm_to_vmem [thread:$0]  %s1, 768, %s144, [#allocation7], 128, 128, 8
        $region16: #{tpu_custom_call.1} parent=11 // pred_fallthru
          _
        // Predicated region
        $region17: #{tpu_custom_call.1} parent=11 // pred_check
          %p150 = pneg %p96
        $region18: #{tpu_custom_call.1} parent=11 // pred_check_branch
          %152 = sbr.rel (%p150) target = $region20
        $region19: #{tpu_custom_call.1} parent=11 // pred_region
          _
        $region20: #{tpu_custom_call.1} parent=11 // pred_fallthru
          _
      $region12: #{tpu_custom_call.1} parent=5 // pred_fallthru
        _
      %p153 = scmp.lt.s32.totalorder %s14, 3
      // Predicated region
      $region21: #{tpu_custom_call.1} parent=5 // pred_check
        %p154 = pneg %p153
      $region22: #{tpu_custom_call.1} parent=5 // pred_check_branch
        %156 = sbr.rel (%p154) target = $region24
      $region23: #{tpu_custom_call.1} parent=5 // pred_region
        // Predicated region
        $region25: #{tpu_custom_call.1} parent=23 // pred_check
          %p157 = pneg %p48
        $region26: #{tpu_custom_call.1} parent=23 // pred_check_branch
          %159 = sbr.rel (%p157) target = $region28
        $region27: #{tpu_custom_call.1} parent=23 // pred_region
          %s160 = sand.u32 %s38, 1
          %s161 = scalar_lea.sflag [#allocation4], %s160
          %s162 = sand.u32 %s38, 1
          %s163 = smul.addr %s162, 32
          %s164 = scalar_lea.vmem [#allocation3], %s163
          %s165 = smul.u32 2, %s21
          %s167 = ssub.s32 512, 512
          %168 = vsyncadd %s161, %s167
          %s169 = smul.addr %s165, 2
          %s170 = smul.addr %s22, 4
          %s171 = sadd.s32 %s169, %s170
          %s172 = smul.addr %s171, 128
          %s173 = scalar_lea.hbm %s0, %s172
          %s174 = sshll.u32 %s164, 4
          %s175 = int_to_ptr.vmem [resolvable:$true] %s174
          %180 = dma.hbm_to_vmem [thread:$0]  %s173, 512, %s175, %s161, 128, 128, 8
        $region28: #{tpu_custom_call.1} parent=23 // pred_fallthru
          _
      $region24: #{tpu_custom_call.1} parent=5 // pred_fallthru
        _
      %p181 = scmp.le.s32.totalorder 1, %s14
      %p182 = scmp.lt.s32.totalorder %s14, 4
      %p183 = pnand %p181, %p182
      %p184 = pneg %p183
      // Predicated region
      $region29: #{tpu_custom_call.1} parent=5 // pred_check
        _
      $region30: #{tpu_custom_call.1} parent=5 // pred_check_branch
        %186 = sbr.rel (%p183) target = $region32
      $region31: #{tpu_custom_call.1} parent=5 // pred_region
        %s187 = ssub.s32 %s14, 1
        %s188 = sand.u32 %s41, 1
        %s189 = scalar_lea.sflag [#allocation4], %s188
        %s190 = sand.u32 %s41, 1
        %s191 = smul.addr %s190, 32
        %s192 = scalar_lea.vmem [#allocation3], %s191
        // Predicated region
        $region33: #{tpu_custom_call.1} parent=31 // pred_check
          %p193 = pneg %p54
        $region34: #{tpu_custom_call.1} parent=31 // pred_check_branch
          %195 = sbr.rel (%p193) target = $region36
        $region35: #{tpu_custom_call.1} parent=31 // pred_region
          %196 = dma.done %s189, 512
        $region36: #{tpu_custom_call.1} parent=31 // pred_fallthru
          _
        // Predicated region
        $region37: #{tpu_custom_call.1} parent=31 // pred_check
          %p197 = pneg %p75
        $region38: #{tpu_custom_call.1} parent=31 // pred_check_branch
          %199 = sbr.rel (%p197) target = $region40
        $region39: #{tpu_custom_call.1} parent=31 // pred_region
          %200 = dma.done [#allocation7], 768
        $region40: #{tpu_custom_call.1} parent=31 // pred_fallthru
          _
        %s201 = sand.u32 %s41, 1
        %s202 = scalar_lea.sflag [#allocation4], %s201
        %s203 = sand.u32 %s41, 1
        %s204 = smul.addr %s203, 32
        %s205 = scalar_lea.vmem [#allocation3], %s204
        %p206 = pneg %p54
        %p207 = pneg %p51
        %p208 = pneg %p75
        %p209 = pneg %p72
        %p210 = pneg %p96
        %p211 = pneg %p93
        %p212 = pneg %p122
        %p213 = pneg %p119
        %s214 = smul.u32 2, %s23
        %p215 = scmp.eq.s32.totalorder %s24, 0
        // Predicated region
        $region41: #{tpu_custom_call.1} parent=31 // pred_check
          %p216 = pneg %p215
        $region42: #{tpu_custom_call.1} parent=31 // pred_check_branch
          %218 = sbr.rel (%p216) target = $region44
        $region43: #{tpu_custom_call.1} parent=31 // pred_region
          %219 = vst [vmem:[#allocation2] sm:$0x3] 0.0
        $region44: #{tpu_custom_call.1} parent=31 // pred_fallthru
          _
        %v220 = vld [vmem:[%s192] sm:$0xff]
        %v221 = vld [vmem:[%s192 + $0x8] sm:$0xff]
        %v222 = vld [vmem:[%s192 + $0x10] sm:$0xff]
        %v223 = vld [vmem:[%s192 + $0x18] sm:$0xff]
        %vm224 = vcmask 400384
        %v225 = vsel %vm224, %v220, 0.0
        %226 = vadd.xlane.f32.xlu0 %v225
        %v227 = vpop.xlane.xlu0 %226
        %v228 = vsel %vm224, %v221, 0.0
        %229 = vadd.xlane.f32.xlu0 %v228
        %v230 = vpop.xlane.xlu0 %229
        %v231 = vsel %vm224, %v222, 0.0
        %232 = vadd.xlane.f32.xlu0 %v231
        %v233 = vpop.xlane.xlu0 %232
        %v234 = vsel %vm224, %v223, 0.0
        %235 = vadd.xlane.f32.xlu0 %v234
        %v236 = vpop.xlane.xlu0 %235
        %s237 = smul.u32 %s24, 16
        %s238 = scalar_lea.vmem [#allocation6], %s237
        %v239 = vld [vmem:[%s238] sm:$0xff]
        %v240 = vld [vmem:[%s238 + $0x8] sm:$0xff]
        %v241 = vld [vmem:[#allocation2] sm:$0x3]
        %v246 = vlaneseq
        %v247 = vand.u32 %v246, 127
        %v248 = vlaneseq
        %v249 = vshrl.u32 %v248, 7
        %v250 = vsub.s32 %v247, %v249
        %v251 = vrot.slane %v227, %v250
        %v252 = vadd.s32 %v247, 4294967288
        %v253 = vlaneseq
        %v254 = vshrl.u32 %v253, 7
        %v255 = vsub.s32 %v252, %v254
        %v256 = vrot.slane %v230, %v255
        %vm257 = vcmask 130112
        %v258 = vsel %vm257, %v256, %v251
        %v259 = vlaneseq
        %v260 = vshrl.u32 %v259, 7
        %v261 = vsub.s32 %v247, %v260
        %v262 = vrot.slane %v233, %v261
        %v263 = vlaneseq
        %v264 = vshrl.u32 %v263, 7
        %v265 = vsub.s32 %v252, %v264
        %v266 = vrot.slane %v236, %v265
        %v267 = vsel %vm257, %v266, %v262
        %vm268 = vcmask 1041409
        %v269 = vsel %vm268, %v267, %v258
        %vm270 = vcmask 130048
        %v271 = vsel %vm270, %v269, 0
        %273 = vmatprep.subr.mxu0 0.0
        %274 = vmatpush1.msra.mxu0 %v239
        %275 = vmatprep.subr.mxu0 0.0
        %276 = vmatpush1.msra.mxu0 %v240
        %277 = vmatprep.subr.mxu0 0.0
        %278 = vmatpush1.msra.mxu0 0.0
        %279 = vmatprep.subr.mxu0 0.0
        %280 = vmatpush1.msra.mxu0 0.0
        %281 = vmatprep.subr.mxu0 0.0
        %282 = vmatpush1.msra.mxu0 0.0
        %283 = vmatprep.subr.mxu0 0.0
        %284 = vmatpush1.msra.mxu0 0.0
        %285 = vmatprep.subr.mxu0 0.0
        %286 = vmatpush1.msra.mxu0 0.0
        %287 = vmatprep.subr.mxu0 0.0
        %288 = vmatpush1.msra.mxu0 0.0
        %289 = vmatprep.subr.mxu0 0.0
        %290 = vmatpush1.msra.mxu0 0.0
        %291 = vmatprep.subr.mxu0 0.0
        %292 = vmatpush1.msra.mxu0 0.0
        %293 = vmatprep.subr.mxu0 0.0
        %294 = vmatpush1.msra.mxu0 0.0
        %295 = vmatprep.subr.mxu0 0.0
        %296 = vmatpush1.msra.mxu0 0.0
        %297 = vmatprep.subr.mxu0 0.0
        %298 = vmatpush1.msra.mxu0 0.0
        %299 = vmatprep.subr.mxu0 0.0
        %300 = vmatpush1.msra.mxu0 0.0
        %301 = vmatprep.subr.mxu0 0.0
        %302 = vmatpush1.msra.mxu0 0.0
        %303 = vmatprep.subr.mxu0 0.0
        %304 = vmatpush1.msra.mxu0 0.0
        %305 = vmatprep.subr.mxu0 0.0
        %306 = vmatpush1.msra.mxu0 0.0
        %307 = vmatprep.subr.mxu0 0.0
        %308 = vmatpush1.msra.mxu0 0.0
        %309 = vmatprep.subr.mxu0 0.0
        %310 = vmatpush1.msra.mxu0 0.0
        %311 = vmatprep.subr.mxu0 0.0
        %312 = vmatpush1.msra.mxu0 0.0
        %313 = vmatprep.subr.mxu0 0.0
        %314 = vmatpush1.msra.mxu0 0.0
        %315 = vmatprep.subr.mxu0 0.0
        %316 = vmatpush1.msra.mxu0 0.0
        %317 = vmatprep.subr.mxu0 0.0
        %318 = vmatpush1.msra.mxu0 0.0
        %319 = vmatprep.subr.mxu0 0.0
        %320 = vmatpush1.msra.mxu0 0.0
        %321 = vmatprep.subr.mxu0 0.0
        %322 = vmatpush1.msra.mxu0 0.0
        %323 = vmatprep.subr.mxu0 0.0
        %324 = vmatpush1.msra.mxu0 0.0
        %325 = vmatprep.subr.mxu0 0.0
        %326 = vmatpush1.msra.mxu0 0.0
        %327 = vmatprep.subr.mxu0 0.0
        %328 = vmatpush1.msra.mxu0 0.0
        %329 = vmatprep.subr.mxu0 0.0
        %330 = vmatpush1.msra.mxu0 0.0
        %331 = vmatprep.subr.mxu0 0.0
        %332 = vmatpush1.msra.mxu0 0.0
        %333 = vmatprep.subr.mxu0 0.0
        %334 = vmatpush1.msra.mxu0 0.0
        %335 = vmatprep.subr.mxu0 0.0
        %336 = vmatpush1.msra.mxu0 0.0
        %337 = vmatprep.mubr.f32.mxu0 0.0
        %338 = vmatmul.mubr.f32.gmra.mrb[0].mxu0 %v271
        %v339 = vpop.f32.mrb[0].mxu0
        %v340 = vadd.f32 0.0, %v339
        %v341 = vpop.f32.mrb[0].mxu0
        %342 = vdwg.mxu0
        %v343 = vadd.f32 %v241, %v340
        %344 = vst [vmem:[#allocation2] sm:$0x3] %v343
        %p345 = scmp.eq.s32.totalorder %s24, 2
        // Predicated region
        $region45: #{tpu_custom_call.1} parent=31 // pred_check
          %p346 = pneg %p345
        $region46: #{tpu_custom_call.1} parent=31 // pred_check_branch
          %348 = sbr.rel (%p346) target = $region48
        $region47: #{tpu_custom_call.1} parent=31 // pred_region
          %v349 = vld [vmem:[#allocation2] sm:$0x3]
          %v350 = vmul.f32 %v349, 0.006802721
          %v351 = vld [vmem:[%s2] sm:$0x1]
          %v353 = vlaneseq
          %v354 = vshrl.u32 %v353, 7
          %v355 = vsub.s32 0, %v354
          %v356 = vrot.slane %v351, %v355
          %v358 = vadd.f32 %v350, %v356
          %359 = vst [vmem:[#allocation8] sm:$0x3] %v358
        $region48: #{tpu_custom_call.1} parent=31 // pred_fallthru
          _
        // Predicated region
        $region49: #{tpu_custom_call.1} parent=31 // pred_check
          %p360 = pneg %p119
        $region50: #{tpu_custom_call.1} parent=31 // pred_check_branch
          %362 = sbr.rel (%p360) target = $region52
        $region51: #{tpu_custom_call.1} parent=31 // pred_region
          %s364 = ssub.s32 32, 32
          %365 = vsyncadd [#allocation5], %s364
          %s366 = smul.addr %s23, 32
          %s367 = scalar_lea.hbm %s3, %s366
          %s369 = sshll.u32 [#allocation8], 4
          %s370 = int_to_ptr.vmem [resolvable:$true] %s369
          %372 = dma.vmem_to_hbm [thread:$0]  %s370, 32, %s367, [#allocation5]
        $region52: #{tpu_custom_call.1} parent=31 // pred_fallthru
          _
        // Predicated region
        $region53: #{tpu_custom_call.1} parent=31 // pred_check
          %p373 = pneg %p119
        $region54: #{tpu_custom_call.1} parent=31 // pred_check_branch
          %375 = sbr.rel (%p373) target = $region56
        $region55: #{tpu_custom_call.1} parent=31 // pred_region
          %376 = dma.done [#allocation5], 32
        $region56: #{tpu_custom_call.1} parent=31 // pred_fallthru
          _
      $region32: #{tpu_custom_call.1} parent=5 // pred_fallthru
        _
      %p377 = scmp.le.s32.totalorder 2, %s14
      // Predicated region
      $region57: #{tpu_custom_call.1} parent=5 // pred_check
        %p378 = pneg %p377
      $region58: #{tpu_custom_call.1} parent=5 // pred_check_branch
        %380 = sbr.rel (%p378) target = $region60
      $region59: #{tpu_custom_call.1} parent=5 // pred_region
        %s381 = ssub.s32 %s14, 2
      $region60: #{tpu_custom_call.1} parent=5 // pred_fallthru
        _
    $region6: #{tpu_custom_call.1} parent=1 // loop_footer
      %s18 = sadd.s32 1, %s14
    $region7: #{tpu_custom_call.1} parent=1 // loop_footer_branch
      %13 = sbr.rel target = $region3
    $region8: #{tpu_custom_call.1} parent=1 // loop_exit
      _
    %382 = vsyncpa [#allocation4], 1
    %s383 = scalar_lea.sflag [#allocation4], 1
    %384 = vsyncpa %s383, 1
    %385 = vsyncpa [#allocation7], 1
    %386 = vsyncpa [#allocation5], 1
    %s387 = scalar_lea.sflag [#allocation5], 1
    %388 = vsyncpa %s387, 1

</llo_original>
